<compile_context>
chip_gen: v7x
topology: tpu7x:2x2x1
jax: 0.10.0
libtpu: 0.0.40
codegen_flags: <defaults>
</compile_context>

<pallas_src>
import jax
import jax.numpy as jnp
from jax.experimental import pallas as pl
from jax.experimental.pallas import tpu as pltpu

_LANES = 128               # lane-dense last dim (one full vreg width)
_MAX_ROWS_PER_TILE = 512   # 512x128 f32 tile = 256 KiB (+64 KiB i8); 2x-buffered fits any VMEM


def _ktloss_kernel(pred_ref, tgt_ref, ll_ref, cnt_ref):
    """One (rows_per_tile, 128) tile: masked log-likelihood + lane-wise partial sums."""
    # Initialize the resident per-P accumulators at the start of the reduction axis.
    @pl.when(pl.program_id(1) == 0)
    def _init():
        ll_ref[...] = jnp.zeros_like(ll_ref)
        cnt_ref[...] = jnp.zeros_like(cnt_ref)

    pred = pred_ref[...]                       # (R, 128) f32
    tgt = tgt_ref[...].astype(jnp.int32)       # i8 -> i32 widen on the VPU (cheap)

    valid = tgt != -1                          # ignore_index == -1 (also absorbs padding)
    is_one = tgt == 1

    # Single log per element: select the probability, then one EUP log.
    # Matches torch's log(p) / log(1-p) selection exactly.
    p_sel = jnp.where(is_one, pred, 1.0 - pred)
    logp = jnp.log(p_sel)

    ll = jnp.where(valid, logp, 0.0)           # masked log-likelihood
    cnt = jnp.where(valid, 1.0, 0.0)

    # Reduce over the sublane (row) axis only; keep results lane-resident and
    # accumulate into the output block (resident across the "arbitrary" axis).
    ll_ref[0, 0, :] += ll.sum(axis=0)
    cnt_ref[0, 0, :] += cnt.sum(axis=0)


def _round_up(x, m):
    return ((x + m - 1) // m) * m


@jax.jit
def kt_loss(pred_answers, real_answers):
    """Pallas KTLoss: pred_answers [B, L] probabilities, real_answers [B, L+1] in {-1,0,1}."""
    pred = pred_answers.astype(jnp.float32)
    tgt = real_answers[:, 1:].astype(jnp.int8)   # labels fit in int8 -> 1 B/elem HBM traffic
    assert pred.shape == tgt.shape, (pred.shape, tgt.shape)

    n = pred.size
    rows_needed = max(1, pl.cdiv(n, _LANES))
    rows_per_tile = min(_MAX_ROWS_PER_TILE, _round_up(rows_needed, 32))  # 32: i8 sublane pack
    num_parts = 2 if rows_needed >= 2 * rows_per_tile else 1             # megacore split (v7x)
    rows_total = _round_up(rows_needed, rows_per_tile * num_parts)
    tiles_per_part = rows_total // (rows_per_tile * num_parts)
    n_pad = rows_total * _LANES

    # Lane-dense slab; padded targets are -1 so the ignore mask absorbs them,
    # padded preds are 0 (never logged since their target is -1 -> select 1-p=1).
    pred2 = jnp.pad(pred.reshape(-1), (0, n_pad - n)).reshape(rows_total, _LANES)
    tgt2 = jnp.pad(tgt.reshape(-1), (0, n_pad - n),
                   constant_values=-1).reshape(rows_total, _LANES)

    row_block = lambda p, t: (p * tiles_per_part + t, 0)

    ll_part, cnt_part = pl.pallas_call(
        _ktloss_kernel,
        grid=(num_parts, tiles_per_part),
        in_specs=[
            pl.BlockSpec((rows_per_tile, _LANES), row_block),   # pred f32 tile
            pl.BlockSpec((rows_per_tile, _LANES), row_block),   # target i8 tile
        ],
        out_shape=(
            jax.ShapeDtypeStruct((num_parts, 1, _LANES), jnp.float32),
            jax.ShapeDtypeStruct((num_parts, 1, _LANES), jnp.float32),
        ),
        out_specs=(
            pl.BlockSpec((1, 1, _LANES), lambda p, t: (p, 0, 0)),
            pl.BlockSpec((1, 1, _LANES), lambda p, t: (p, 0, 0)),
        ),
        compiler_params=pltpu.CompilerParams(
            dimension_semantics=("parallel", "arbitrary"),
        ),
        cost_estimate=pl.CostEstimate(
            flops=8 * n_pad,
            transcendentals=n_pad,
            bytes_accessed=5 * n_pad + 2 * 4 * num_parts * _LANES,
        ),
    )(pred2, tgt2)

    # Tiny (2 * P * 128 element) final cross-lane reduce + divide: wrapper glue.
    total_ll = jnp.sum(ll_part)
    count = jnp.sum(cnt_part)
    # count == 0 (all targets ignored) -> NaN, same as torch NLLLoss(ignore_index=-1).
    return -total_ll / count


def _reference_loss(pred_answers, real_answers):
    # Pure-JAX reference of the PyTorch module (for sanity checking).
    real = real_answers[:, 1:].astype(jnp.int32)
    valid = real != -1
    logp = jnp.where(real == 1, jnp.log(pred_answers), jnp.log(1.0 - pred_answers))
    return -jnp.sum(jnp.where(valid, logp, 0.0)) / jnp.sum(valid.astype(jnp.float32))


if __name__ == "__main__":
    key = jax.random.PRNGKey(0)
    k1, k2, k3, k4 = jax.random.split(key, 4)

    # Small shapes consistent with the module: batch=2, seq=9 (pred has seq-1=8).
    B, T = 2, 9
    pred_small = jax.random.uniform(k1, (B, T - 1), jnp.float32, minval=0.05, maxval=0.95)
    real_small = jax.random.randint(k2, (B, T), minval=-1, maxval=2, dtype=jnp.int32)

    loss_small = jax.block_until_ready(kt_loss(pred_small, real_small))
    ref_small = _reference_loss(pred_small, real_small)
    assert jnp.allclose(loss_small, ref_small, atol=1e-5, rtol=1e-5), (loss_small, ref_small)

    # Second check exercising multi-tile accumulation, tail padding and the
    # "parallel" partial-sum axis (grid = (2, 2)).
    B2, T2 = 40, 3301
    pred_big = jax.random.uniform(k3, (B2, T2 - 1), jnp.float32, minval=0.05, maxval=0.95)
    real_big = jax.random.randint(k4, (B2, T2), minval=-1, maxval=2, dtype=jnp.int32)

    loss_big = jax.block_until_ready(kt_loss(pred_big, real_big))
    ref_big = _reference_loss(pred_big, real_big)
    assert jnp.allclose(loss_big, ref_big, atol=1e-4, rtol=1e-4), (loss_big, ref_big)

    print("KERNEL_OK")
</pallas_src>

<mosaic_0001>
module attributes {stable_mosaic.version = 11 : i64} {
  func.func @_ktloss_kernel(%arg0: i32, %arg1: i32, %arg2: memref<32x128xf32, #tpu.memory_space<vmem>>, %arg3: memref<32x128xi8, #tpu.memory_space<vmem>>, %arg4: memref<1x1x128xf32, #tpu.memory_space<vmem>>, %arg5: memref<1x1x128xf32, #tpu.memory_space<vmem>>) attributes {dimension_semantics = [#tpu.dimension_semantics<parallel>, #tpu.dimension_semantics<arbitrary>], iteration_bounds = array<i64: 1, 1>, scalar_prefetch = 0 : i64, scratch_operands = 0 : i64, tpu.core_type = #tpu.core_type<tc>, window_params = [{transform_indices = @transform_0, window_bounds = array<i64: 32, 128>}, {transform_indices = @transform_1, window_bounds = array<i64: 32, 128>}, {transform_indices = @transform_2, window_bounds = array<i64: 1, 1, 128>}, {transform_indices = @transform_3, window_bounds = array<i64: 1, 1, 128>}]} {
    %c0_i32 = arith.constant 0 : i32
    %0 = arith.cmpi eq, %arg1, %c0_i32 : i32
    %1 = arith.extui %0 : i1 to i32
    %c0_i32_0 = arith.constant 0 : i32
    %2 = arith.cmpi ne, %1, %c0_i32_0 : i32
    scf.if %2 {
      %cst_21 = arith.constant 0.000000e+00 : f32
      %33 = vector.broadcast %cst_21 : f32 to vector<1x1x128xf32>
      %c0_22 = arith.constant 0 : index
      %c0_23 = arith.constant 0 : index
      %c0_24 = arith.constant 0 : index
      %34 = vector.load %arg4[%c0_22, %c0_23, %c0_24] : memref<1x1x128xf32, #tpu.memory_space<vmem>>, vector<1x1x128xf32>
      tpu.vector_store %arg4[%c0_22, %c0_23, %c0_24], %33 {strides = array<i32>} : memref<1x1x128xf32, #tpu.memory_space<vmem>>, vector<1x1x128xf32>,
      %cst_25 = arith.constant 0.000000e+00 : f32
      %35 = vector.broadcast %cst_25 : f32 to vector<1x1x128xf32>
      %c0_26 = arith.constant 0 : index
      %c0_27 = arith.constant 0 : index
      %c0_28 = arith.constant 0 : index
      %36 = vector.load %arg5[%c0_26, %c0_27, %c0_28] : memref<1x1x128xf32, #tpu.memory_space<vmem>>, vector<1x1x128xf32>
      tpu.vector_store %arg5[%c0_26, %c0_27, %c0_28], %35 {strides = array<i32>} : memref<1x1x128xf32, #tpu.memory_space<vmem>>, vector<1x1x128xf32>,
    } else {
    }
    %c0 = arith.constant 0 : index
    %c0_1 = arith.constant 0 : index
    %3 = vector.load %arg2[%c0, %c0_1] : memref<32x128xf32, #tpu.memory_space<vmem>>, vector<32x128xf32>
    %c0_2 = arith.constant 0 : index
    %c0_3 = arith.constant 0 : index
    %4 = vector.load %arg3[%c0_2, %c0_3] : memref<32x128xi8, #tpu.memory_space<vmem>>, vector<32x128xi8>
    %5 = arith.extsi %4 : vector<32x128xi8> to vector<32x128xi32>
    %c-1_i32 = arith.constant -1 : i32
    %6 = vector.broadcast %c-1_i32 : i32 to vector<32x128xi32>
    %7 = arith.cmpi ne, %5, %6 : vector<32x128xi32>
    %c1_i32 = arith.constant 1 : i32
    %8 = vector.broadcast %c1_i32 : i32 to vector<32x128xi32>
    %9 = arith.cmpi eq, %5, %8 : vector<32x128xi32>
    %cst = arith.constant 1.000000e+00 : f32
    %10 = vector.broadcast %cst : f32 to vector<32x128xf32>
    %11 = arith.subf %10, %3 : vector<32x128xf32>
    %12 = arith.select %9, %3, %11 : vector<32x128xi1>, vector<32x128xf32>
    %13 = math.log %12 : vector<32x128xf32>
    %cst_4 = arith.constant 0.000000e+00 : f32
    %14 = vector.broadcast %cst_4 : f32 to vector<32x128xf32>
    %15 = arith.select %7, %13, %14 : vector<32x128xi1>, vector<32x128xf32>
    %cst_5 = arith.constant 1.000000e+00 : f32
    %cst_6 = arith.constant 0.000000e+00 : f32
    %16 = vector.broadcast %cst_5 : f32 to vector<32x128xf32>
    %17 = vector.broadcast %cst_6 : f32 to vector<32x128xf32>
    %18 = arith.select %7, %16, %17 : vector<32x128xi1>, vector<32x128xf32>
    %c0_7 = arith.constant 0 : index
    %c0_8 = arith.constant 0 : index
    %c0_9 = arith.constant 0 : index
    %19 = vector.load %arg4[%c0_7, %c0_8, %c0_9] : memref<1x1x128xf32, #tpu.memory_space<vmem>>, vector<1x1x128xf32>
    %20 = vector.shape_cast %19 : vector<1x1x128xf32> to vector<128xf32>
    %cst_10 = arith.constant dense<0.000000e+00> : vector<128xf32>
    %21 = vector.multi_reduction <add>, %15, %cst_10 [0] : vector<32x128xf32> to vector<128xf32>
    %22 = arith.addf %20, %21 : vector<128xf32>
    %c0_11 = arith.constant 0 : index
    %c0_12 = arith.constant 0 : index
    %c0_13 = arith.constant 0 : index
    %23 = vector.load %arg4[%c0_11, %c0_12, %c0_13] : memref<1x1x128xf32, #tpu.memory_space<vmem>>, vector<1x1x128xf32>
    %24 = vector.shape_cast %23 : vector<1x1x128xf32> to vector<128xf32>
    %25 = vector.shape_cast %22 : vector<128xf32> to vector<1x1x128xf32>
    tpu.vector_store %arg4[%c0_11, %c0_12, %c0_13], %25 {strides = array<i32>} : memref<1x1x128xf32, #tpu.memory_space<vmem>>, vector<1x1x128xf32>,
    %c0_14 = arith.constant 0 : index
    %c0_15 = arith.constant 0 : index
    %c0_16 = arith.constant 0 : index
    %26 = vector.load %arg5[%c0_14, %c0_15, %c0_16] : memref<1x1x128xf32, #tpu.memory_space<vmem>>, vector<1x1x128xf32>
    %27 = vector.shape_cast %26 : vector<1x1x128xf32> to vector<128xf32>
    %cst_17 = arith.constant dense<0.000000e+00> : vector<128xf32>
    %28 = vector.multi_reduction <add>, %18, %cst_17 [0] : vector<32x128xf32> to vector<128xf32>
    %29 = arith.addf %27, %28 : vector<128xf32>
    %c0_18 = arith.constant 0 : index
    %c0_19 = arith.constant 0 : index
    %c0_20 = arith.constant 0 : index
    %30 = vector.load %arg5[%c0_18, %c0_19, %c0_20] : memref<1x1x128xf32, #tpu.memory_space<vmem>>, vector<1x1x128xf32>
    %31 = vector.shape_cast %30 : vector<1x1x128xf32> to vector<128xf32>
    %32 = vector.shape_cast %29 : vector<128xf32> to vector<1x1x128xf32>
    tpu.vector_store %arg5[%c0_18, %c0_19, %c0_20], %32 {strides = array<i32>} : memref<1x1x128xf32, #tpu.memory_space<vmem>>, vector<1x1x128xf32>,
    return
  }
  func.func @transform_0(%arg0: i32, %arg1: i32) -> (i32, i32) {
    %c1_i32 = arith.constant 1 : i32
    %0 = arith.muli %arg0, %c1_i32 : i32
    %1 = arith.addi %0, %arg1 : i32
    %c0_i32 = arith.constant 0 : i32
    %c0_i32_0 = arith.constant 0 : i32
    return %1, %c0_i32 : i32, i32
  }
  func.func @transform_1(%arg0: i32, %arg1: i32) -> (i32, i32) {
    %c1_i32 = arith.constant 1 : i32
    %0 = arith.muli %arg0, %c1_i32 : i32
    %1 = arith.addi %0, %arg1 : i32
    %c0_i32 = arith.constant 0 : i32
    %c0_i32_0 = arith.constant 0 : i32
    return %1, %c0_i32 : i32, i32
  }
  func.func @transform_2(%arg0: i32, %arg1: i32) -> (i32, i32, i32) {
    %c0_i32 = arith.constant 0 : i32
    %c0_i32_0 = arith.constant 0 : i32
    %c0_i32_1 = arith.constant 0 : i32
    return %arg0, %c0_i32, %c0_i32_0 : i32, i32, i32
  }
  func.func @transform_3(%arg0: i32, %arg1: i32) -> (i32, i32, i32) {
    %c0_i32 = arith.constant 0 : i32
    %c0_i32_0 = arith.constant 0 : i32
    %c0_i32_1 = arith.constant 0 : i32
    return %arg0, %c0_i32, %c0_i32_0 : i32, i32, i32
  }
}

</mosaic_0001>

<llo_original>
// kernel: kt_loss.1
$region0: #{kt_loss.1}
  #allocation0 [shape = 'u32[]', space=smem, size = 0x4, offset = 0x4, fixed_abs, tag = 'smem constant byte address 0x4 - core index']
  #allocation1 [shape = 'u32[144,128]{1,0:T(1,128)}', space=vmem, size = 0x12000, scoped, tag = 'internal scratch']
  %s0 = inlined_call_operand.vmem [shape: f32[32,128], index: 0, kind: input, shape index: {}]
  %s1 = inlined_call_operand.vmem [shape: s8[32,128], index: 1, kind: input, shape index: {}]
  %s2 = inlined_call_operand.vmem [shape: f32[1,1,128], index: 2, kind: output, shape index: {0}]
  %s3 = inlined_call_operand.vmem [shape: f32[1,1,128], index: 3, kind: output, shape index: {1}]
  %4 = xla_tuple %s2, %s3
  %s5 = sld [smem:[#allocation0]]
  $region30: #{kt_loss.1} parent=0
    _
  %s7 = ssub.s32 1, %s5
  %s8 = scalar_select 0, %s7, %s5
  // Predicated region
  $region2: #{kt_loss.1} parent=0 // pred_check
    _
  $region3: #{kt_loss.1} parent=0 // pred_check_branch
    %10 = sbr.rel (0) target = $region5
  $region4: #{kt_loss.1} parent=0 // pred_region
    %s11 = sadd.s32 0, 0
    %s12 = smul.u32 4, %s11
    %p13 = scmp.lt.s32.totalorder %s12, 3
    %s14 = scalar_select %p13, %s12, 3
    %s15 = smul.addr %s14, 8
    %s16 = scalar_lea.vmem %s0, %s15
    %s17 = sadd.s32 0, 0
    %s18 = smul.u32 4, %s17
  $region5: #{kt_loss.1} parent=0 // pred_fallthru
    _
  // Predicated region
  $region6: #{kt_loss.1} parent=0 // pred_check
    _
  $region7: #{kt_loss.1} parent=0 // pred_check_branch
    %20 = sbr.rel (0) target = $region9
  $region8: #{kt_loss.1} parent=0 // pred_region
    %s21 = sadd.s32 0, 0
    %p22 = scmp.lt.s32.totalorder %s21, 0
    %s23 = scalar_select %p22, %s21, 0
    %s24 = smul.addr %s23, 8
    %s25 = scalar_lea.vmem %s1, %s24
    %s26 = sadd.s32 0, 0
  $region9: #{kt_loss.1} parent=0 // pred_fallthru
    _
  %s27 = sadd.s32 0, 0
  %s28 = smul.u32 4, %s27
  %p29 = scmp.lt.s32.totalorder %s28, 3
  %s30 = scalar_select %p29, %s28, 3
  %s31 = smul.addr %s30, 8
  %s32 = scalar_lea.vmem %s0, %s31
  %s33 = sadd.s32 0, 0
  %p34 = scmp.lt.s32.totalorder %s33, 0
  %s35 = scalar_select %p34, %s33, 0
  %s36 = smul.addr %s35, 8
  %s37 = scalar_lea.vmem %s1, %s36
  %s38 = sadd.s32 0, 0
  %s39 = smul.u32 4, %s38
  %p40 = scmp.lt.s32.totalorder %s39, 3
  %s41 = scalar_select %p40, %s39, 3
  %s42 = smul.addr %s41, 8
  %s43 = scalar_lea.vmem %s0, %s42
  %s44 = sadd.s32 0, 0
  %s45 = smul.u32 4, %s44
  %s46 = sadd.s32 0, 0
  %p47 = scmp.lt.s32.totalorder %s46, 0
  %s48 = scalar_select %p47, %s46, 0
  %s49 = smul.addr %s48, 8
  %s50 = scalar_lea.vmem %s1, %s49
  %s51 = sadd.s32 0, 0
  %p52 = scmp.eq.s32.totalorder 0, 0
  // Predicated region
  $region10: #{kt_loss.1} parent=0 // pred_check
    %p53 = pneg %p52
  $region11: #{kt_loss.1} parent=0 // pred_check_branch
    %55 = sbr.rel (%p53) target = $region13
  $region12: #{kt_loss.1} parent=0 // pred_region
    %56 = vst [vmem:[%s2] sm:$0x1] 0.0
    %57 = vst [vmem:[%s3] sm:$0x1] 0.0
  $region13: #{kt_loss.1} parent=0 // pred_fallthru
    _
  %v58 = vld [vmem:[%s43] sm:$0xff]
  %v59 = vld [vmem:[%s43 + $0x8] sm:$0xff]
  %v60 = vld [vmem:[%s43 + $0x10] sm:$0xff]
  %v61 = vld [vmem:[%s43 + $0x18] sm:$0xff]
  %v62 = vld [vmem:[%s50] sm:$0xff]
  %v63 = vunpack.c.0.s8 %v62
  %v64 = vunpack.c.1.s8 %v62
  %v65 = vunpack.c.2.s8 %v62
  %v66 = vunpack.c.3.s8 %v62
  %vm67 = vcmp.ne.s32.totalorder %v63, 4294967295
  %vm68 = vcmp.ne.s32.totalorder %v64, 4294967295
  %vm69 = vcmp.ne.s32.totalorder %v65, 4294967295
  %vm70 = vcmp.ne.s32.totalorder %v66, 4294967295
  %vm71 = vcmp.eq.s32.totalorder %v63, 1
  %vm72 = vcmp.eq.s32.totalorder %v64, 1
  %vm73 = vcmp.eq.s32.totalorder %v65, 1
  %vm74 = vcmp.eq.s32.totalorder %v66, 1
  %v75 = vsub.f32 1.0, %v58
  %v76 = vsub.f32 1.0, %v59
  %v77 = vsub.f32 1.0, %v60
  %v78 = vsub.f32 1.0, %v61
  %v79 = vsel %vm71, %v58, %v75
  %v80 = vsel %vm72, %v59, %v76
  %v81 = vsel %vm73, %v60, %v77
  %v82 = vsel %vm74, %v61, %v78
  %v83 = vlog2.pop %v79
  %v84 = vmul.f32 %v83, 0.6931472
  %v85 = vlog2.pop %v80
  %v86 = vmul.f32 %v85, 0.6931472
  %v87 = vlog2.pop %v81
  %v88 = vmul.f32 %v87, 0.6931472
  %v89 = vlog2.pop %v82
  %v90 = vmul.f32 %v89, 0.6931472
  %v91 = vsel %vm67, %v84, 0.0
  %v92 = vsel %vm68, %v86, 0.0
  %v93 = vsel %vm69, %v88, 0.0
  %v94 = vsel %vm70, %v90, 0.0
  %v95 = vsel %vm67, 1.0, 0.0
  %v96 = vsel %vm68, 1.0, 0.0
  %v97 = vsel %vm69, 1.0, 0.0
  %v98 = vsel %vm70, 1.0, 0.0
  %v99 = vld [vmem:[%s2] sm:$0x1]
  %v100 = vadd.f32 %v91, %v92
  %v101 = vadd.f32 %v100, %v93
  %v102 = vadd.f32 %v101, %v94
  %v103 = vrot.slane %v102, 4
  %v104 = vadd.f32 %v102, %v103
  %v105 = vrot.slane %v104, 2
  %v106 = vadd.f32 %v104, %v105
  %v107 = vrot.slane %v106, 1
  %v108 = vadd.f32 %v106, %v107
  %v109 = vadd.f32 %v99, %v108
  %110 = vst [vmem:[%s2] sm:$0x1] %v109
  %v111 = vld [vmem:[%s3] sm:$0x1]
  %v112 = vadd.f32 %v95, %v96
  %v113 = vadd.f32 %v112, %v97
  %v114 = vadd.f32 %v113, %v98
  %v115 = vrot.slane %v114, 4
  %v116 = vadd.f32 %v114, %v115
  %v117 = vrot.slane %v116, 2
  %v118 = vadd.f32 %v116, %v117
  %v119 = vrot.slane %v118, 1
  %v120 = vadd.f32 %v118, %v119
  %v121 = vadd.f32 %v111, %v120
  %122 = vst [vmem:[%s3] sm:$0x1] %v121
  // Predicated region
  $region14: #{kt_loss.1} parent=0 // pred_check
    _
  $region15: #{kt_loss.1} parent=0 // pred_check_branch
    %124 = sbr.rel (0) target = $region17
  $region16: #{kt_loss.1} parent=0 // pred_region
    _
  $region17: #{kt_loss.1} parent=0 // pred_fallthru
    _
  // Predicated region
  $region18: #{kt_loss.1} parent=0 // pred_check
    _
  $region19: #{kt_loss.1} parent=0 // pred_check_branch
    %126 = sbr.rel (0) target = $region21
  $region20: #{kt_loss.1} parent=0 // pred_region
    _
  $region21: #{kt_loss.1} parent=0 // pred_fallthru
    _
  // Predicated region
  $region22: #{kt_loss.1} parent=0 // pred_check
    _
  $region23: #{kt_loss.1} parent=0 // pred_check_branch
    %128 = sbr.rel (0) target = $region25
  $region24: #{kt_loss.1} parent=0 // pred_region
    _
  $region25: #{kt_loss.1} parent=0 // pred_fallthru
    _
  // Predicated region
  $region26: #{kt_loss.1} parent=0 // pred_check
    _
  $region27: #{kt_loss.1} parent=0 // pred_check_branch
    %130 = sbr.rel (0) target = $region29
  $region28: #{kt_loss.1} parent=0 // pred_region
    _
  $region29: #{kt_loss.1} parent=0 // pred_fallthru
    _

</llo_original>
